<compile_context>
chip_gen: v5e
topology: v5e:2x2
jax: 0.10.0
libtpu: 0.0.40
codegen_flags: <defaults>
</compile_context>

<pallas_src>
import functools
import math

import jax
import jax.numpy as jnp
from jax.experimental import pallas as pl
from jax.experimental.pallas import tpu as pltpu


def _round_up(x, m):
    return ((x + m - 1) // m) * m


# ----------------------------------------------------------------------------
# Pallas fused GEMM: out = maybe_relu((x @ w) * scale + bias [+ residual])
#   x/w are bf16 (MXU native), accumulator + epilogue in f32.
# ----------------------------------------------------------------------------
def _matmul_affine_kernel(*refs, relu, has_residual):
    if has_residual:
        x_ref, w_ref, sb_ref, r_ref, o_ref, acc_ref = refs
    else:
        x_ref, w_ref, sb_ref, o_ref, acc_ref = refs
        r_ref = None
    k = pl.program_id(2)

    @pl.when(k == 0)
    def _():
        acc_ref[...] = jnp.zeros_like(acc_ref)

    acc_ref[...] += jnp.dot(x_ref[...], w_ref[...],
                            preferred_element_type=jnp.float32)

    @pl.when(k == pl.num_programs(2) - 1)
    def _():
        y = acc_ref[...] * sb_ref[0:1, :] + sb_ref[1:2, :]
        if has_residual:
            y = y + r_ref[...]
        if relu:
            y = jnp.maximum(y, 0.0)
        o_ref[...] = y.astype(o_ref.dtype)


def _pick_tk(K, max_tk=2048):
    """Largest multiple-of-128 divisor of round_up(K, 128) that is <= max_tk."""
    Kp = _round_up(K, 128)
    nk = Kp // 128
    best = 1
    for d in range(1, nk + 1):
        if nk % d == 0 and 128 * d <= max_tk:
            best = d
    return Kp, 128 * best


def matmul_affine(x, w, scale, bias, relu, residual=None):
    """out = maybe_relu((x @ w) * scale + bias [+ residual]).

    x:(M,K)  w:(K,N)  scale/bias:(N,)  residual:(M,N) or None.
    """
    M, K = x.shape
    _, N = w.shape

    tm = 128 if M >= 128 else _round_up(M, 8)
    Mp = _round_up(M, tm)
    Kp, tk = _pick_tk(K)
    Np = _round_up(N, 128)
    # tn=256 only when there are still >=2 N tiles (v7x: keep both TCs busy);
    # 128 otherwise (also the native MXU width on v5e).
    tn = 256 if (Np % 256 == 0 and Np >= 512) else 128

    # Pads are no-ops for all the expensive (aligned) layers; only tiny layers
    # (stem K=147, layer1 K=64/576, classifier N=2) actually pad.
    xp = jnp.pad(x.astype(jnp.bfloat16), ((0, Mp - M), (0, Kp - K)))
    wp = jnp.pad(w.astype(jnp.bfloat16), ((0, Kp - K), (0, Np - N)))
    sb = jnp.stack([jnp.pad(scale, (0, Np - N)),
                    jnp.pad(bias, (0, Np - N))], axis=0)  # (2, Np) f32

    in_specs = [
        pl.BlockSpec((tm, tk), lambda i, j, k: (i, k)),
        pl.BlockSpec((tk, tn), lambda i, j, k: (k, j)),
        pl.BlockSpec((2, tn), lambda i, j, k: (0, j)),
    ]
    args = [xp, wp, sb]
    has_residual = residual is not None
    if has_residual:
        rp = jnp.pad(residual.astype(jnp.float32), ((0, Mp - M), (0, Np - N)))
        in_specs.append(pl.BlockSpec((tm, tn), lambda i, j, k: (i, j)))
        args.append(rp)

    grid = (Mp // tm, Np // tn, Kp // tk)

    out = pl.pallas_call(
        functools.partial(_matmul_affine_kernel, relu=relu,
                          has_residual=has_residual),
        out_shape=jax.ShapeDtypeStruct((Mp, Np), jnp.float32),
        grid_spec=pltpu.PrefetchScalarGridSpec(
            num_scalar_prefetch=0,
            grid=grid,
            in_specs=in_specs,
            out_specs=pl.BlockSpec((tm, tn), lambda i, j, k: (i, j)),
            scratch_shapes=[pltpu.VMEM((tm, tn), jnp.float32)],
        ),
        compiler_params=pltpu.CompilerParams(
            dimension_semantics=("parallel", "parallel", "arbitrary"),
            vmem_limit_bytes=32 * 1024 * 1024),
    )(*args)
    return out[:M, :N]


# ----------------------------------------------------------------------------
# Convolution = im2col (glue) + Pallas fused GEMM (hot path)
# ----------------------------------------------------------------------------
def conv2d(x, w, scale, bias, stride=1, padding=0, dilation=1, relu=False,
           residual=None):
    """x:(N,H,W,C) NHWC f32, w:(KH,KW,C,OC), scale/bias:(OC,), residual NHWC."""
    N, H, W, C = x.shape
    KH, KW, _, OC = w.shape

    # Tap pruning for heavily dilated 'same' 3x3 convs (ASPP rates 12/24/36 on
    # a small feature map): every non-center tap lands entirely in the zero
    # halo, so the conv reduces exactly to its center 1x1 tap.  Removes the
    # giant padded tensor and the 9x im2col HBM traffic.
    if (KH == 3 and KW == 3 and stride == 1 and padding == dilation
            and dilation >= H and dilation >= W):
        return conv2d(x, w[1:2, 1:2], scale, bias, stride=1, padding=0,
                      dilation=1, relu=relu, residual=residual)

    xb = x.astype(jnp.bfloat16)  # stream MXU operand in bf16 from here on
    xpad = jnp.pad(xb, ((0, 0), (padding, padding), (padding, padding), (0, 0)))
    Hp, Wp = H + 2 * padding, W + 2 * padding
    OH = (Hp - (KH - 1) * dilation - 1) // stride + 1
    OW = (Wp - (KW - 1) * dilation - 1) // stride + 1

    if KH == 1 and KW == 1:
        patches = xpad[:, ::stride, ::stride, :][:, :OH, :OW, :]
        patches = patches.reshape(N * OH * OW, C)
    else:
        cols = []
        for i in range(KH):
            for j in range(KW):
                sl = jax.lax.slice(
                    xpad,
                    (0, i * dilation, j * dilation, 0),
                    (N, i * dilation + (OH - 1) * stride + 1,
                     j * dilation + (OW - 1) * stride + 1, C),
                    (1, stride, stride, 1))
                cols.append(sl)
        patches = jnp.concatenate(cols, axis=-1).reshape(N * OH * OW, KH * KW * C)

    wmat = w.reshape(KH * KW * C, OC)
    res2d = None
    if residual is not None:
        res2d = residual.reshape(N * OH * OW, OC)
    out = matmul_affine(patches, wmat, scale, bias, relu, res2d)
    return out.reshape(N, OH, OW, OC)


def maxpool2d(x, ksize=3, stride=2, padding=1):
    # TODO(synk): max-pool done with lax.reduce_window (glue), not a Pallas kernel.
    return jax.lax.reduce_window(
        x, -jnp.inf, jax.lax.max,
        (1, ksize, ksize, 1), (1, stride, stride, 1),
        ((0, 0), (padding, padding), (padding, padding), (0, 0)))


def bilinear_resize(x, out_h, out_w):
    """PyTorch F.interpolate(mode='bilinear', align_corners=False) semantics."""
    # TODO(synk): bilinear upsample uses XLA gathers (glue), not a Pallas kernel.
    N, H, W, C = x.shape

    def coords(out_size, in_size):
        o = jnp.arange(out_size, dtype=jnp.float32)
        src = (o + 0.5) * (in_size / out_size) - 0.5
        src = jnp.clip(src, 0.0, in_size - 1)
        lo = jnp.floor(src).astype(jnp.int32)
        hi = jnp.minimum(lo + 1, in_size - 1)
        frac = src - lo.astype(jnp.float32)
        return lo, hi, frac

    hlo, hhi, hf = coords(out_h, H)
    wlo, whi, wf = coords(out_w, W)
    top = x[:, hlo, :, :]
    bot = x[:, hhi, :, :]
    row = top * (1.0 - hf)[None, :, None, None] + bot * hf[None, :, None, None]
    left = row[:, :, wlo, :]
    right = row[:, :, whi, :]
    return (left * (1.0 - wf)[None, None, :, None]
            + right * wf[None, None, :, None])


# ----------------------------------------------------------------------------
# Deterministic synthetic parameters
# ----------------------------------------------------------------------------
class ParamGen:
    def __init__(self, seed):
        self.key = jax.random.PRNGKey(seed)
        self.count = 0

    def normal(self, shape, std):
        k = jax.random.fold_in(self.key, self.count)
        self.count += 1
        return std * jax.random.normal(k, shape, dtype=jnp.float32)


def conv_bn(gen, x, in_c, out_c, ksize, stride=1, padding=0, dilation=1,
            relu=True, residual=None):
    """Conv2d(bias=False) + BatchNorm2d (eval, folded) + optional add + ReLU."""
    fan_in = ksize * ksize * in_c
    w = gen.normal((ksize, ksize, in_c, out_c), 1.0 / math.sqrt(fan_in))
    gamma = 1.0 + gen.normal((out_c,), 0.05)
    beta = gen.normal((out_c,), 0.05)
    running_mean = gen.normal((out_c,), 0.05)
    running_var = jnp.ones((out_c,), jnp.float32)
    scale = gamma * jax.lax.rsqrt(running_var + 1e-5)
    bias = beta - running_mean * scale
    return conv2d(x, w, scale, bias, stride, padding, dilation, relu, residual)


# ----------------------------------------------------------------------------
# ResNet-50 backbone (replace_stride_with_dilation=[False, True, True])
# ----------------------------------------------------------------------------
def bottleneck(gen, x, inplanes, planes, stride, dilation, downsample):
    width = planes
    out = conv_bn(gen, x, inplanes, width, 1, relu=True)
    out = conv_bn(gen, out, width, width, 3, stride=stride, padding=dilation,
                  dilation=dilation, relu=True)
    if downsample:
        identity = conv_bn(gen, x, inplanes, planes * 4, 1, stride=stride,
                           relu=False)
    else:
        identity = x
    # conv3 + BN + skip-add + ReLU fused into a single Pallas GEMM epilogue.
    return conv_bn(gen, out, width, planes * 4, 1, relu=True, residual=identity)


def resnet50_backbone(gen, x):
    x = conv_bn(gen, x, 3, 64, 7, stride=2, padding=3, relu=True)
    x = maxpool2d(x, 3, 2, 1)

    state = {"inplanes": 64, "dilation": 1}

    def layer(x, planes, blocks, stride, dilate):
        prev_dilation = state["dilation"]
        if dilate:
            state["dilation"] *= stride
            stride = 1
        need_ds = (stride != 1) or (state["inplanes"] != planes * 4)
        x = bottleneck(gen, x, state["inplanes"], planes, stride,
                       prev_dilation, need_ds)
        state["inplanes"] = planes * 4
        for _ in range(1, blocks):
            x = bottleneck(gen, x, state["inplanes"], planes, 1,
                           state["dilation"], False)
        return x

    x = layer(x, 64, 3, 1, False)
    x = layer(x, 128, 4, 2, False)
    x = layer(x, 256, 6, 2, True)
    x = layer(x, 512, 3, 2, True)
    return x


# ----------------------------------------------------------------------------
# DeepLabV3 head (ASPP with rates 12/24/36 + classifier)
# ----------------------------------------------------------------------------
def aspp(gen, x, in_c=2048, out_c=256, rates=(12, 24, 36)):
    N, H, W, _ = x.shape
    branches = [conv_bn(gen, x, in_c, out_c, 1, relu=True)]
    for r in rates:
        # conv2d auto-prunes these to center-tap 1x1 GEMMs when the dilation
        # exceeds the feature-map size (all other taps hit the zero halo).
        branches.append(conv_bn(gen, x, in_c, out_c, 3, padding=r,
                                dilation=r, relu=True))
    # ASPPPooling: global average pool -> 1x1 conv-bn-relu -> upsample
    pooled = jnp.mean(x, axis=(1, 2), keepdims=True)
    pb = conv_bn(gen, pooled, in_c, out_c, 1, relu=True)
    pb = jnp.broadcast_to(pb, (N, H, W, out_c))  # bilinear upsample of 1x1
    branches.append(pb)

    cat = jnp.concatenate(branches, axis=-1)  # (N,H,W,5*out_c)
    proj = conv_bn(gen, cat, 5 * out_c, out_c, 1, relu=True)
    # nn.Dropout(0.5) -> identity in eval mode
    return proj


def deeplab_head(gen, x, num_classes=2):
    y = aspp(gen, x)
    y = conv_bn(gen, y, 256, 256, 3, padding=1, relu=True)
    w = gen.normal((1, 1, 256, num_classes), 1.0 / math.sqrt(256))
    b = gen.normal((num_classes,), 0.05)
    return conv2d(y, w, jnp.ones((num_classes,), jnp.float32), b, relu=False)


# ----------------------------------------------------------------------------
# HandSegModel forward: y = deeplabv3_resnet50(x)['out']
# ----------------------------------------------------------------------------
def hand_seg_forward(x_nchw, seed=42, num_classes=2):
    gen = ParamGen(seed)
    x = jnp.transpose(x_nchw.astype(jnp.float32), (0, 2, 3, 1))  # NCHW->NHWC
    N, H, W, _ = x.shape
    feat = resnet50_backbone(gen, x)              # (N, H/8, W/8, 2048)
    y = deeplab_head(gen, feat, num_classes)      # (N, H/8, W/8, num_classes)
    y = bilinear_resize(y, H, W)                  # (N, H, W, num_classes)
    return jnp.transpose(y, (0, 3, 1, 2))         # back to NCHW


if __name__ == "__main__":
    key = jax.random.PRNGKey(0)
    # DeepLabV3-ResNet50 expects 3-channel images; keep spatial small.
    x = jax.random.normal(key, (2, 3, 64, 64), dtype=jnp.float32)
    out = hand_seg_forward(x)
    out = jax.block_until_ready(out)
    assert out.shape == (2, 2, 64, 64), out.shape
    assert out.dtype == jnp.float32
    assert bool(jnp.all(jnp.isfinite(out)))
    print("KERNEL_OK")
</pallas_src>

<mosaic_0001>
module attributes {stable_mosaic.version = 11 : i64} {
  func.func @_matmul_affine_kernel(%arg0: i32, %arg1: i32, %arg2: i32, %arg3: memref<128x256xbf16, #tpu.memory_space<vmem>>, %arg4: memref<256x128xbf16, #tpu.memory_space<vmem>>, %arg5: memref<2x128xf32, #tpu.memory_space<vmem>>, %arg6: memref<128x128xf32, #tpu.memory_space<vmem>>, %arg7: memref<128x128xf32, #tpu.memory_space<vmem>>) attributes {dimension_semantics = [#tpu.dimension_semantics<parallel>, #tpu.dimension_semantics<parallel>, #tpu.dimension_semantics<arbitrary>], iteration_bounds = array<i64: 16, 1, 1>, scalar_prefetch = 0 : i64, scratch_operands = 1 : i64, tpu.core_type = #tpu.core_type<tc>, window_params = [{transform_indices = @transform_0, window_bounds = array<i64: 128, 256>}, {transform_indices = @transform_1, window_bounds = array<i64: 256, 128>}, {transform_indices = @transform_2, window_bounds = array<i64: 2, 128>}, {transform_indices = @transform_3, window_bounds = array<i64: 128, 128>}]} {
    %c0_i32 = arith.constant 0 : i32
    %0 = arith.cmpi eq, %arg2, %c0_i32 : i32
    %1 = arith.extui %0 : i1 to i32
    %c0_i32_0 = arith.constant 0 : i32
    %2 = arith.cmpi ne, %1, %c0_i32_0 : i32
    scf.if %2 {
      %cst_10 = arith.constant 0.000000e+00 : f32
      %12 = vector.broadcast %cst_10 : f32 to vector<128x128xf32>
      %c0_11 = arith.constant 0 : index
      %c0_12 = arith.constant 0 : index
      %13 = vector.load %arg7[%c0_11, %c0_12] : memref<128x128xf32, #tpu.memory_space<vmem>>, vector<128x128xf32>
      tpu.vector_store %arg7[%c0_11, %c0_12], %12 {strides = array<i32>} : memref<128x128xf32, #tpu.memory_space<vmem>>, vector<128x128xf32>,
    } else {
    }
    %c0 = arith.constant 0 : index
    %c0_1 = arith.constant 0 : index
    %3 = vector.load %arg7[%c0, %c0_1] : memref<128x128xf32, #tpu.memory_space<vmem>>, vector<128x128xf32>
    %c0_2 = arith.constant 0 : index
    %c0_3 = arith.constant 0 : index
    %4 = vector.load %arg3[%c0_2, %c0_3] : memref<128x256xbf16, #tpu.memory_space<vmem>>, vector<128x256xbf16>
    %c0_4 = arith.constant 0 : index
    %c0_5 = arith.constant 0 : index
    %5 = vector.load %arg4[%c0_4, %c0_5] : memref<256x128xbf16, #tpu.memory_space<vmem>>, vector<256x128xbf16>
    %cst = arith.constant dense<0.000000e+00> : vector<128x128xf32>
    %6 = tpu.matmul %4, %5, %cst {dimension_numbers = #tpu.dot_dimension_numbers<[1], [0], [0], [1], [0, 0, 1, 1], [], []>} : vector<128x256xbf16>, vector<256x128xbf16>, vector<128x128xf32> -> vector<128x128xf32>
    %7 = arith.addf %3, %6 : vector<128x128xf32>
    %c0_6 = arith.constant 0 : index
    %c0_7 = arith.constant 0 : index
    %8 = vector.load %arg7[%c0_6, %c0_7] : memref<128x128xf32, #tpu.memory_space<vmem>>, vector<128x128xf32>
    tpu.vector_store %arg7[%c0_6, %c0_7], %7 {strides = array<i32>} : memref<128x128xf32, #tpu.memory_space<vmem>>, vector<128x128xf32>,
    %c0_i32_8 = arith.constant 0 : i32
    %9 = arith.cmpi eq, %arg2, %c0_i32_8 : i32
    %10 = arith.extui %9 : i1 to i32
    %c0_i32_9 = arith.constant 0 : i32
    %11 = arith.cmpi ne, %10, %c0_i32_9 : i32
    scf.if %11 {
      %c0_10 = arith.constant 0 : index
      %c0_11 = arith.constant 0 : index
      %12 = vector.load %arg7[%c0_10, %c0_11] : memref<128x128xf32, #tpu.memory_space<vmem>>, vector<128x128xf32>
      %c0_12 = arith.constant 0 : index
      %c0_13 = arith.constant 0 : index
      %13 = vector.load %arg5[%c0_12, %c0_13] : memref<2x128xf32, #tpu.memory_space<vmem>>, vector<1x128xf32>
      %14 = vector.broadcast %13 : vector<1x128xf32> to vector<128x128xf32>
      %15 = arith.mulf %12, %14 : vector<128x128xf32>
      %c1 = arith.constant 1 : index
      %c0_14 = arith.constant 0 : index
      %16 = vector.load %arg5[%c1, %c0_14] : memref<2x128xf32, #tpu.memory_space<vmem>>, vector<1x128xf32>
      %17 = vector.broadcast %16 : vector<1x128xf32> to vector<128x128xf32>
      %18 = arith.addf %15, %17 : vector<128x128xf32>
      %cst_15 = arith.constant 0.000000e+00 : f32
      %19 = vector.broadcast %cst_15 : f32 to vector<128x128xf32>
      %20 = arith.maximumf %18, %19 : vector<128x128xf32>
      %c0_16 = arith.constant 0 : index
      %c0_17 = arith.constant 0 : index
      %21 = vector.load %arg6[%c0_16, %c0_17] : memref<128x128xf32, #tpu.memory_space<vmem>>, vector<128x128xf32>
      tpu.vector_store %arg6[%c0_16, %c0_17], %20 {strides = array<i32>} : memref<128x128xf32, #tpu.memory_space<vmem>>, vector<128x128xf32>,
    } else {
    }
    return
  }
  func.func @transform_0(%arg0: i32, %arg1: i32, %arg2: i32) -> (i32, i32) {
    %c0_i32 = arith.constant 0 : i32
    return %arg0, %arg2 : i32, i32
  }
  func.func @transform_1(%arg0: i32, %arg1: i32, %arg2: i32) -> (i32, i32) {
    %c0_i32 = arith.constant 0 : i32
    return %arg2, %arg1 : i32, i32
  }
  func.func @transform_2(%arg0: i32, %arg1: i32, %arg2: i32) -> (i32, i32) {
    %c0_i32 = arith.constant 0 : i32
    %c0_i32_0 = arith.constant 0 : i32
    return %c0_i32, %arg1 : i32, i32
  }
  func.func @transform_3(%arg0: i32, %arg1: i32, %arg2: i32) -> (i32, i32) {
    %c0_i32 = arith.constant 0 : i32
    return %arg0, %arg1 : i32, i32
  }
}

</mosaic_0001>

<llo_original>
// kernel: tpu_custom_call.1
$region0: #{tpu_custom_call.1}
  #allocation0 [shape = 'u32[]', space=smem, size = 0x4, offset = 0x4, fixed_abs, tag = 'smem constant byte address 0x4 - core index']
  #allocation1 [shape = 'u32[72,128]{1,0:T(1,128)}', space=vmem, size = 0x9000, scoped, tag = 'internal scratch']
  #allocation2 [shape = 'f32[128,128]{1,0:T(8,128)}', space=vmem, size = 0x10000, scoped, tag = 'scratch operand']
  %s0 = inlined_call_operand.hbm [shape: bf16[2048,256], index: 0, kind: input, shape index: {}]
  %s1 = inlined_call_operand.hbm [shape: bf16[256,128], index: 1, kind: input, shape index: {}]
  %s2 = inlined_call_operand.hbm [shape: f32[2,128], index: 2, kind: input, shape index: {}]
  %s3 = inlined_call_operand.hbm [shape: f32[2048,128], index: 3, kind: output, shape index: {}]
  %s4 = sld [smem:[#allocation0]]
  $region65: #{tpu_custom_call.1} parent=0
    _
  %s6 = ssub.s32 1, %s4
  %s7 = scalar_select 0, %s6, %s4
  $region1: #{tpu_custom_call.1} parent=0
    #allocation3 [shape = 'u8[131072]{0}', space=vmem, size = 0x20000, scoped, tag = 'input window, operand 0']
    #allocation4 [shape = 's32[2]{0}', space=sflag, size = 0x8, scoped, tag = 'scoped memory for tpu_custom_call.1']
    #allocation5 [shape = 's32[2]{0}', space=sflag, size = 0x8, scoped, tag = 'scoped memory for tpu_custom_call.1']
    #allocation6 [shape = 'u8[65536]{0}', space=vmem, size = 0x10000, scoped, tag = 'input window, operand 1, single buffered']
    #allocation7 [shape = 's32[1]{0}', space=sflag, size = 0x4, scoped, tag = 'scoped memory for tpu_custom_call.1']
    #allocation8 [shape = 'u8[1024]{0}', space=vmem, size = 0x400, scoped, tag = 'input window, operand 2, single buffered']
    #allocation9 [shape = 'u8[131072]{0}', space=vmem, size = 0x20000, scoped, tag = 'output window, operand 0']
    %8 = vsyncpa [#allocation4], 0
    %s9 = scalar_lea.sflag [#allocation4], 1
    %10 = vsyncpa %s9, 0
    %11 = vsyncpa [#allocation7], 0
    %12 = vsyncpa [#allocation5], 0
    %s13 = scalar_lea.sflag [#allocation5], 1
    %14 = vsyncpa %s13, 0
    loop: start=0, step=1, limit=18
    $region2: #{tpu_custom_call.1} parent=1 // loop_pre_header
      _
    $region3: #{tpu_custom_call.1} parent=1 // loop_header
      %s16 = sphi 0, %s20
      %p17 = scmp.ge.s32.totalorder %s16, 18
      %s23 = sphi 0, %s42
      %s24 = sphi 0, %s38
      %s25 = sphi 0, %s34
      %s26 = sphi 0, %s23
      %s27 = sphi 0, %s24
      %s28 = sphi 0, %s25
      %s29 = sphi 0, %s26
      %s30 = sphi 0, %s27
      %s31 = sphi 0, %s28
      %s47 = sphi 0, %s49
      %s50 = sphi 0, %s47
      %s51 = sphi 0, %s50
      %s67 = sphi 0, %s51
      %s75 = sphi 0, %s77
      %s78 = sphi 0, %s75
      %s79 = sphi 0, %s78
      %s95 = sphi 0, %s79
      %s101 = sphi 0, %s103
      %s104 = sphi 0, %s101
      %s105 = sphi 0, %s104
      %s121 = sphi 0, %s105
      %s129 = sphi 0, %s131
      %s132 = sphi 0, %s129
      %s133 = sphi 0, %s132
      %s149 = sphi 0, %s133
    $region4: #{tpu_custom_call.1} parent=1 // loop_header_branch
      %19 = sbr.rel (%p17) target = $region8
    $region5: #{tpu_custom_call.1} parent=1 // loop_body
      %s21 = ssub.s32 %s16, 1
      %s22 = ssub.s32 %s16, 2
      %s32 = sadd.s32 1, %s25
      %p33 = scmp.ge.s32.totalorder %s32, 1
      %s34 = scalar_select %p33, 0, %s32
      %s35 = sadd.s32 1, %s24
      %s36 = scalar_select %p33, %s35, %s24
      %p37 = scmp.ge.s32.totalorder %s36, 1
      %s38 = scalar_select %p37, 0, %s36
      %s39 = sadd.s32 1, %s23
      %s40 = scalar_select %p37, %s39, %s23
      %p41 = scmp.ge.s32.totalorder %s40, 16
      %s42 = scalar_select %p41, 0, %s40
      %s43 = ssub.s32 %s23, %s42
      %s44 = ssub.s32 %s25, %s34
      %s45 = sor.u32 %s43, %s44
      %p46 = scmp.eq.s32.totalorder %s45, 0
      %s48 = sadd.s32 %s47, 1
      %s49 = scalar_select %p46, %s47, %s48
      %p52 = pneg %p46
      %p53 = scmp.eq.s32.totalorder %s16, 15
      %p54 = por %p52, %p53
      %p55 = scmp.ne.s32.totalorder %s47, %s50
      %p56 = scmp.eq.s32.totalorder %s16, 0
      %p57 = por %p55, %p56
      %p58 = scmp.ne.s32.totalorder %s47, %s50
      %p59 = scmp.eq.s32.totalorder %s21, 15
      %p60 = por %p58, %p59
      %p61 = scmp.ne.s32.totalorder %s50, %s51
      %p62 = scmp.eq.s32.totalorder %s21, 0
      %p63 = por %p61, %p62
      %p64 = scmp.ne.s32.totalorder %s50, %s51
      %p65 = scmp.eq.s32.totalorder %s22, 15
      %p66 = por %p64, %p65
      %p68 = scmp.ne.s32.totalorder %s51, %s67
      %p69 = scmp.eq.s32.totalorder %s22, 0
      %p70 = por %p68, %p69
      %s71 = ssub.s32 %s25, %s34
      %s72 = ssub.s32 %s24, %s38
      %s73 = sor.u32 %s71, %s72
      %p74 = scmp.eq.s32.totalorder %s73, 0
      %s76 = sadd.s32 %s75, 1
      %s77 = scalar_select %p74, %s75, %s76
      %p80 = pneg %p74
      %p81 = scmp.eq.s32.totalorder %s16, 15
      %p82 = por %p80, %p81
      %p83 = scmp.ne.s32.totalorder %s75, %s78
      %p84 = scmp.eq.s32.totalorder %s16, 0
      %p85 = por %p83, %p84
      %p86 = scmp.ne.s32.totalorder %s75, %s78
      %p87 = scmp.eq.s32.totalorder %s21, 15
      %p88 = por %p86, %p87
      %p89 = scmp.ne.s32.totalorder %s78, %s79
      %p90 = scmp.eq.s32.totalorder %s21, 0
      %p91 = por %p89, %p90
      %p92 = scmp.ne.s32.totalorder %s78, %s79
      %p93 = scmp.eq.s32.totalorder %s22, 15
      %p94 = por %p92, %p93
      %p96 = scmp.ne.s32.totalorder %s79, %s95
      %p97 = scmp.eq.s32.totalorder %s22, 0
      %p98 = por %p96, %p97
      %s99 = ssub.s32 %s24, %s38
      %p100 = scmp.eq.s32.totalorder %s99, 0
      %s102 = sadd.s32 %s101, 1
      %s103 = scalar_select %p100, %s101, %s102
      %p106 = pneg %p100
      %p107 = scmp.eq.s32.totalorder %s16, 15
      %p108 = por %p106, %p107
      %p109 = scmp.ne.s32.totalorder %s101, %s104
      %p110 = scmp.eq.s32.totalorder %s16, 0
      %p111 = por %p109, %p110
      %p112 = scmp.ne.s32.totalorder %s101, %s104
      %p113 = scmp.eq.s32.totalorder %s21, 15
      %p114 = por %p112, %p113
      %p115 = scmp.ne.s32.totalorder %s104, %s105
      %p116 = scmp.eq.s32.totalorder %s21, 0
      %p117 = por %p115, %p116
      %p118 = scmp.ne.s32.totalorder %s104, %s105
      %p119 = scmp.eq.s32.totalorder %s22, 15
      %p120 = por %p118, %p119
      %p122 = scmp.ne.s32.totalorder %s105, %s121
      %p123 = scmp.eq.s32.totalorder %s22, 0
      %p124 = por %p122, %p123
      %s125 = ssub.s32 %s23, %s42
      %s126 = ssub.s32 %s24, %s38
      %s127 = sor.u32 %s125, %s126
      %p128 = scmp.eq.s32.totalorder %s127, 0
      %s130 = sadd.s32 %s129, 1
      %s131 = scalar_select %p128, %s129, %s130
      %p134 = pneg %p128
      %p135 = scmp.eq.s32.totalorder %s16, 15
      %p136 = por %p134, %p135
      %p137 = scmp.ne.s32.totalorder %s129, %s132
      %p138 = scmp.eq.s32.totalorder %s16, 0
      %p139 = por %p137, %p138
      %p140 = scmp.ne.s32.totalorder %s129, %s132
      %p141 = scmp.eq.s32.totalorder %s21, 15
      %p142 = por %p140, %p141
      %p143 = scmp.ne.s32.totalorder %s132, %s133
      %p144 = scmp.eq.s32.totalorder %s21, 0
      %p145 = por %p143, %p144
      %p146 = scmp.ne.s32.totalorder %s132, %s133
      %p147 = scmp.eq.s32.totalorder %s22, 15
      %p148 = por %p146, %p147
      %p150 = scmp.ne.s32.totalorder %s133, %s149
      %p151 = scmp.eq.s32.totalorder %s22, 0
      %p152 = por %p150, %p151
      %p153 = scmp.le.s32.totalorder 1, %s16
      %p154 = scmp.lt.s32.totalorder %s16, 17
      %p155 = pnand %p153, %p154
      %p156 = pneg %p155
      // Predicated region
      $region9: #{tpu_custom_call.1} parent=5 // pred_check
        _
      $region10: #{tpu_custom_call.1} parent=5 // pred_check_branch
        %158 = sbr.rel (%p155) target = $region12
      $region11: #{tpu_custom_call.1} parent=5 // pred_region
        %s159 = ssub.s32 %s16, 1
        // Predicated region
        $region13: #{tpu_custom_call.1} parent=11 // pred_check
          %p160 = pneg %p91
        $region14: #{tpu_custom_call.1} parent=11 // pred_check_branch
          %162 = sbr.rel (%p160) target = $region16
        $region15: #{tpu_custom_call.1} parent=11 // pred_region
          %s163 = smul.u32 32, %s28
          %165 = vsyncadd [#allocation7], 0
          %s166 = sadd.s32 %s27, %s163
          %s167 = smul.addr %s166, 4
          %s168 = scalar_lea.hbm %s1, %s167
          %s169 = sshll.u32 %s168, 4
          %s170 = int_to_ptr.hbm [resolvable:$true] %s169
          %s171 = sshll.u32 [#allocation6], 4
          %s172 = int_to_ptr.vmem [resolvable:$true] %s171
          %177 = dma.hbm_to_vmem [thread:$0]  %s170, 2048, %s172, [#allocation7], 64, 64, 4
        $region16: #{tpu_custom_call.1} parent=11 // pred_fallthru
          _
        // Predicated region
        $region17: #{tpu_custom_call.1} parent=11 // pred_check
          %p178 = pneg %p117
        $region18: #{tpu_custom_call.1} parent=11 // pred_check_branch
          %180 = sbr.rel (%p178) target = $region20
        $region19: #{tpu_custom_call.1} parent=11 // pred_region
          %182 = vsyncadd [#allocation7], 0
          %s183 = smul.addr %s27, 2
          %s184 = scalar_lea.hbm %s2, %s183
          %s186 = sshll.u32 %s184, 4
          %s187 = int_to_ptr.hbm [resolvable:$true] %s186
          %s188 = sshll.u32 [#allocation8], 4
          %s189 = int_to_ptr.vmem [resolvable:$true] %s188
          %191 = dma.hbm_to_vmem [thread:$0]  %s187, 32, %s189, [#allocation7]
        $region20: #{tpu_custom_call.1} parent=11 // pred_fallthru
          _
      $region12: #{tpu_custom_call.1} parent=5 // pred_fallthru
        _
      %p192 = scmp.lt.s32.totalorder %s16, 16
      // Predicated region
      $region21: #{tpu_custom_call.1} parent=5 // pred_check
        %p193 = pneg %p192
      $region22: #{tpu_custom_call.1} parent=5 // pred_check_branch
        %195 = sbr.rel (%p193) target = $region24
      $region23: #{tpu_custom_call.1} parent=5 // pred_region
        // Predicated region
        $region25: #{tpu_custom_call.1} parent=23 // pred_check
          %p196 = pneg %p57
        $region26: #{tpu_custom_call.1} parent=23 // pred_check_branch
          %198 = sbr.rel (%p196) target = $region28
        $region27: #{tpu_custom_call.1} parent=23 // pred_region
          %s199 = sand.u32 %s47, 1
          %s200 = scalar_lea.sflag [#allocation4], %s199
          %s201 = sand.u32 %s47, 1
          %s202 = smul.addr %s201, 128
          %s203 = scalar_lea.vmem [#allocation3], %s202
          %s204 = smul.u32 16, %s23
          %s205 = smul.u32 2, %s25
          %207 = vsyncadd %s200, 0
          %s208 = smul.addr %s204, 2
          %s209 = sadd.s32 %s205, %s208
          %s210 = smul.addr %s209, 4
          %s211 = scalar_lea.hbm %s0, %s210
          %s212 = sshll.u32 %s211, 4
          %s213 = int_to_ptr.hbm [resolvable:$true] %s212
          %s214 = sshll.u32 %s203, 4
          %s215 = int_to_ptr.vmem [resolvable:$true] %s214
          %220 = dma.hbm_to_vmem [thread:$0]  %s213, 2048, %s215, %s200, 128, 128, 8
        $region28: #{tpu_custom_call.1} parent=23 // pred_fallthru
          _
      $region24: #{tpu_custom_call.1} parent=5 // pred_fallthru
        _
      %p221 = scmp.le.s32.totalorder 1, %s16
      %p222 = scmp.lt.s32.totalorder %s16, 17
      %p223 = pnand %p221, %p222
      %p224 = pneg %p223
      // Predicated region
      $region29: #{tpu_custom_call.1} parent=5 // pred_check
        _
      $region30: #{tpu_custom_call.1} parent=5 // pred_check_branch
        %226 = sbr.rel (%p223) target = $region32
      $region31: #{tpu_custom_call.1} parent=5 // pred_region
        %s227 = ssub.s32 %s16, 1
        %s228 = sand.u32 %s50, 1
        %s229 = scalar_lea.sflag [#allocation4], %s228
        %s230 = sand.u32 %s50, 1
        %s231 = smul.addr %s230, 128
        %s232 = scalar_lea.vmem [#allocation3], %s231
        // Predicated region
        $region33: #{tpu_custom_call.1} parent=31 // pred_check
          %p233 = pneg %p63
        $region34: #{tpu_custom_call.1} parent=31 // pred_check_branch
          %235 = sbr.rel (%p233) target = $region36
        $region35: #{tpu_custom_call.1} parent=31 // pred_region
          %237 = dma.done %s229, 2048
        $region36: #{tpu_custom_call.1} parent=31 // pred_fallthru
          _
        // Predicated region
        $region37: #{tpu_custom_call.1} parent=31 // pred_check
          %p238 = pneg %p91
        $region38: #{tpu_custom_call.1} parent=31 // pred_check_branch
          %240 = sbr.rel (%p238) target = $region40
        $region39: #{tpu_custom_call.1} parent=31 // pred_region
          %242 = dma.done [#allocation7], 2048
        $region40: #{tpu_custom_call.1} parent=31 // pred_fallthru
          _
        // Predicated region
        $region41: #{tpu_custom_call.1} parent=31 // pred_check
          %p243 = pneg %p117
        $region42: #{tpu_custom_call.1} parent=31 // pred_check_branch
          %245 = sbr.rel (%p243) target = $region44
        $region43: #{tpu_custom_call.1} parent=31 // pred_region
          %247 = dma.done [#allocation7], 32
        $region44: #{tpu_custom_call.1} parent=31 // pred_fallthru
          _
        %s248 = sand.u32 %s50, 1
        %s249 = scalar_lea.sflag [#allocation4], %s248
        %s250 = sand.u32 %s50, 1
        %s251 = smul.addr %s250, 128
        %s252 = scalar_lea.vmem [#allocation3], %s251
        %p253 = pneg %p63
        %p254 = pneg %p60
        %p255 = pneg %p91
        %p256 = pneg %p88
        %p257 = pneg %p117
        %p258 = pneg %p114
        %p259 = pneg %p145
        %p260 = pneg %p142
        %s261 = sand.u32 %s132, 1
        %s262 = scalar_lea.sflag [#allocation5], %s261
        %s263 = sand.u32 %s132, 1
        %s264 = smul.addr %s263, 128
        %s265 = scalar_lea.vmem [#allocation9], %s264
        %s266 = smul.u32 16, %s26
        %s267 = smul.u32 2, %s28
        %s268 = smul.u32 32, %s28
        %s269 = smul.u32 16, %s26
        %p270 = scmp.eq.s32.totalorder %s28, 0
        // Predicated region
        $region45: #{tpu_custom_call.1} parent=31 // pred_check
          %p271 = pneg %p270
        $region46: #{tpu_custom_call.1} parent=31 // pred_check_branch
          %273 = sbr.rel (%p271) target = $region48
        $region47: #{tpu_custom_call.1} parent=31 // pred_region
          %274 = vst [vmem:[#allocation2] sm:$0xff] 0.0
          %275 = vst [vmem:[#allocation2 + $0x8] sm:$0xff] 0.0
          %276 = vst [vmem:[#allocation2 + $0x10] sm:$0xff] 0.0
          %277 = vst [vmem:[#allocation2 + $0x18] sm:$0xff] 0.0
          %278 = vst [vmem:[#allocation2 + $0x20] sm:$0xff] 0.0
          %279 = vst [vmem:[#allocation2 + $0x28] sm:$0xff] 0.0
          %280 = vst [vmem:[#allocation2 + $0x30] sm:$0xff] 0.0
          %281 = vst [vmem:[#allocation2 + $0x38] sm:$0xff] 0.0
          %282 = vst [vmem:[#allocation2 + $0x40] sm:$0xff] 0.0
          %283 = vst [vmem:[#allocation2 + $0x48] sm:$0xff] 0.0
          %284 = vst [vmem:[#allocation2 + $0x50] sm:$0xff] 0.0
          %285 = vst [vmem:[#allocation2 + $0x58] sm:$0xff] 0.0
          %286 = vst [vmem:[#allocation2 + $0x60] sm:$0xff] 0.0
          %287 = vst [vmem:[#allocation2 + $0x68] sm:$0xff] 0.0
          %288 = vst [vmem:[#allocation2 + $0x70] sm:$0xff] 0.0
          %289 = vst [vmem:[#allocation2 + $0x78] sm:$0xff] 0.0
        $region48: #{tpu_custom_call.1} parent=31 // pred_fallthru
          _
        %v290 = vld [vmem:[#allocation2] sm:$0xff]
        %v291 = vld [vmem:[#allocation2 + $0x8] sm:$0xff]
        %v292 = vld [vmem:[#allocation2 + $0x10] sm:$0xff]
        %v293 = vld [vmem:[#allocation2 + $0x18] sm:$0xff]
        %v294 = vld [vmem:[#allocation2 + $0x20] sm:$0xff]
        %v295 = vld [vmem:[#allocation2 + $0x28] sm:$0xff]
        %v296 = vld [vmem:[#allocation2 + $0x30] sm:$0xff]
        %v297 = vld [vmem:[#allocation2 + $0x38] sm:$0xff]
        %v298 = vld [vmem:[#allocation2 + $0x40] sm:$0xff]
        %v299 = vld [vmem:[#allocation2 + $0x48] sm:$0xff]
        %v300 = vld [vmem:[#allocation2 + $0x50] sm:$0xff]
        %v301 = vld [vmem:[#allocation2 + $0x58] sm:$0xff]
        %v302 = vld [vmem:[#allocation2 + $0x60] sm:$0xff]
        %v303 = vld [vmem:[#allocation2 + $0x68] sm:$0xff]
        %v304 = vld [vmem:[#allocation2 + $0x70] sm:$0xff]
        %v305 = vld [vmem:[#allocation2 + $0x78] sm:$0xff]
        %v306 = vld [vmem:[%s232] sm:$0xff]
        %v307 = vld [vmem:[%s232 + $0x8] sm:$0xff]
        %v308 = vld [vmem:[%s232 + $0x10] sm:$0xff]
        %v309 = vld [vmem:[%s232 + $0x18] sm:$0xff]
        %v310 = vld [vmem:[%s232 + $0x20] sm:$0xff]
        %v311 = vld [vmem:[%s232 + $0x28] sm:$0xff]
        %v312 = vld [vmem:[%s232 + $0x30] sm:$0xff]
        %v313 = vld [vmem:[%s232 + $0x38] sm:$0xff]
        %v314 = vld [vmem:[%s232 + $0x40] sm:$0xff]
        %v315 = vld [vmem:[%s232 + $0x48] sm:$0xff]
        %v316 = vld [vmem:[%s232 + $0x50] sm:$0xff]
        %v317 = vld [vmem:[%s232 + $0x58] sm:$0xff]
        %v318 = vld [vmem:[%s232 + $0x60] sm:$0xff]
        %v319 = vld [vmem:[%s232 + $0x68] sm:$0xff]
        %v320 = vld [vmem:[%s232 + $0x70] sm:$0xff]
        %v321 = vld [vmem:[%s232 + $0x78] sm:$0xff]
        %v322 = vld [vmem:[#allocation6] sm:$0xf]
        %v323 = vld [vmem:[#allocation6 + $0x4] sm:$0xf]
        %v324 = vld [vmem:[#allocation6 + $0x8] sm:$0xf]
        %v325 = vld [vmem:[#allocation6 + $0xc] sm:$0xf]
        %v326 = vld [vmem:[#allocation6 + $0x10] sm:$0xf]
        %v327 = vld [vmem:[#allocation6 + $0x14] sm:$0xf]
        %v328 = vld [vmem:[#allocation6 + $0x18] sm:$0xf]
        %v329 = vld [vmem:[#allocation6 + $0x1c] sm:$0xf]
        %v330 = vld [vmem:[#allocation6 + $0x20] sm:$0xf]
        %v331 = vld [vmem:[#allocation6 + $0x24] sm:$0xf]
        %v332 = vld [vmem:[#allocation6 + $0x28] sm:$0xf]
        %v333 = vld [vmem:[#allocation6 + $0x2c] sm:$0xf]
        %v334 = vld [vmem:[#allocation6 + $0x30] sm:$0xf]
        %v335 = vld [vmem:[#allocation6 + $0x34] sm:$0xf]
        %v336 = vld [vmem:[#allocation6 + $0x38] sm:$0xf]
        %v337 = vld [vmem:[#allocation6 + $0x3c] sm:$0xf]
        %v338 = vld [vmem:[#allocation6 + $0x40] sm:$0xf]
        %v339 = vld [vmem:[#allocation6 + $0x44] sm:$0xf]
        %v340 = vld [vmem:[#allocation6 + $0x48] sm:$0xf]
        %v341 = vld [vmem:[#allocation6 + $0x4c] sm:$0xf]
        %v342 = vld [vmem:[#allocation6 + $0x50] sm:$0xf]
        %v343 = vld [vmem:[#allocation6 + $0x54] sm:$0xf]
        %v344 = vld [vmem:[#allocation6 + $0x58] sm:$0xf]
        %v345 = vld [vmem:[#allocation6 + $0x5c] sm:$0xf]
        %v346 = vld [vmem:[#allocation6 + $0x60] sm:$0xf]
        %v347 = vld [vmem:[#allocation6 + $0x64] sm:$0xf]
        %v348 = vld [vmem:[#allocation6 + $0x68] sm:$0xf]
        %v349 = vld [vmem:[#allocation6 + $0x6c] sm:$0xf]
        %v350 = vld [vmem:[#allocation6 + $0x70] sm:$0xf]
        %v351 = vld [vmem:[#allocation6 + $0x74] sm:$0xf]
        %v352 = vld [vmem:[#allocation6 + $0x78] sm:$0xf]
        %v353 = vld [vmem:[#allocation6 + $0x7c] sm:$0xf]
        %v370 = vunpack.c.l.b16 %v306
        %v371 = vunpack.c.h.b16 %v306
        %v372 = vunpack.c.l.b16 %v307
        %v373 = vunpack.c.h.b16 %v307
        %v374 = vunpack.c.l.b16 %v308
        %v375 = vunpack.c.h.b16 %v308
        %v376 = vunpack.c.l.b16 %v309
        %v377 = vunpack.c.h.b16 %v309
        %v378 = vunpack.c.l.b16 %v310
        %v379 = vunpack.c.h.b16 %v310
        %v380 = vunpack.c.l.b16 %v311
        %v381 = vunpack.c.h.b16 %v311
        %v382 = vunpack.c.l.b16 %v312
        %v383 = vunpack.c.h.b16 %v312
        %v384 = vunpack.c.l.b16 %v313
        %v385 = vunpack.c.h.b16 %v313
        %v386 = vunpack.c.l.b16 %v314
        %v387 = vunpack.c.h.b16 %v314
        %v388 = vunpack.c.l.b16 %v315
        %v389 = vunpack.c.h.b16 %v315
        %v390 = vunpack.c.l.b16 %v316
        %v391 = vunpack.c.h.b16 %v316
        %v392 = vunpack.c.l.b16 %v317
        %v393 = vunpack.c.h.b16 %v317
        %v394 = vunpack.c.l.b16 %v318
        %v395 = vunpack.c.h.b16 %v318
        %v396 = vunpack.c.l.b16 %v319
        %v397 = vunpack.c.h.b16 %v319
        %v398 = vunpack.c.l.b16 %v320
        %v399 = vunpack.c.h.b16 %v320
        %v400 = vunpack.c.l.b16 %v321
        %v401 = vunpack.c.h.b16 %v321
        %v402 = vpack.c.b16 %v372, %v370
        %v403 = vpack.c.b16 %v373, %v371
        %v404 = vpack.c.b16 %v376, %v374
        %v405 = vpack.c.b16 %v377, %v375
        %v406 = vpack.c.b16 %v380, %v378
        %v407 = vpack.c.b16 %v381, %v379
        %v408 = vpack.c.b16 %v384, %v382
        %v409 = vpack.c.b16 %v385, %v383
        %v410 = vpack.c.b16 %v388, %v386
        %v411 = vpack.c.b16 %v389, %v387
        %v412 = vpack.c.b16 %v392, %v390
        %v413 = vpack.c.b16 %v393, %v391
        %v414 = vpack.c.b16 %v396, %v394
        %v415 = vpack.c.b16 %v397, %v395
        %v416 = vpack.c.b16 %v400, %v398
        %v417 = vpack.c.b16 %v401, %v399
        %v466 = vunpack.c.l.b16 %v322
        %v467 = vunpack.c.l.b16 %v323
        %v468 = vunpack.c.l.b16 %v324
        %v469 = vunpack.c.l.b16 %v325
        %v470 = vunpack.c.l.b16 %v326
        %v471 = vunpack.c.l.b16 %v327
        %v472 = vunpack.c.l.b16 %v328
        %v473 = vunpack.c.l.b16 %v329
        %v474 = vunpack.c.l.b16 %v330
        %v475 = vunpack.c.l.b16 %v331
        %v476 = vunpack.c.l.b16 %v332
        %v477 = vunpack.c.l.b16 %v333
        %v478 = vunpack.c.l.b16 %v334
        %v479 = vunpack.c.l.b16 %v335
        %v480 = vunpack.c.l.b16 %v336
        %v481 = vunpack.c.l.b16 %v337
        %v482 = vunpack.c.l.b16 %v338
        %v483 = vunpack.c.l.b16 %v339
        %v484 = vunpack.c.l.b16 %v340
        %v485 = vunpack.c.l.b16 %v341
        %v486 = vunpack.c.l.b16 %v342
        %v487 = vunpack.c.l.b16 %v343
        %v488 = vunpack.c.l.b16 %v344
        %v489 = vunpack.c.l.b16 %v345
        %v490 = vunpack.c.l.b16 %v346
        %v491 = vunpack.c.l.b16 %v347
        %v492 = vunpack.c.l.b16 %v348
        %v493 = vunpack.c.l.b16 %v349
        %v494 = vunpack.c.l.b16 %v350
        %v495 = vunpack.c.l.b16 %v351
        %v496 = vunpack.c.l.b16 %v352
        %v497 = vunpack.c.l.b16 %v353
        %v498 = vpack.c.b16 %v467, %v466
        %v499 = vpack.c.b16 %v469, %v468
        %v500 = vpack.c.b16 %v471, %v470
        %v501 = vpack.c.b16 %v473, %v472
        %v502 = vpack.c.b16 %v475, %v474
        %v503 = vpack.c.b16 %v477, %v476
        %v504 = vpack.c.b16 %v479, %v478
        %v505 = vpack.c.b16 %v481, %v480
        %v506 = vpack.c.b16 %v483, %v482
        %v507 = vpack.c.b16 %v485, %v484
        %v508 = vpack.c.b16 %v487, %v486
        %v509 = vpack.c.b16 %v489, %v488
        %v510 = vpack.c.b16 %v491, %v490
        %v511 = vpack.c.b16 %v493, %v492
        %v512 = vpack.c.b16 %v495, %v494
        %v513 = vpack.c.b16 %v497, %v496
        %530 = vmatpush.bf16.msra.mxu0 %v505
        %531 = vmatpush.bf16.msra.mxu0 %v504
        %532 = vmatpush.bf16.msra.mxu0 %v503
        %533 = vmatpush.bf16.msra.mxu0 %v502
        %534 = vmatpush.bf16.msra.mxu0 %v501
        %535 = vmatpush.bf16.msra.mxu0 %v500
        %536 = vmatpush.bf16.msra.mxu0 %v499
        %537 = vmatpush.bf16.msra.mxu0 %v498
        %538 = vmatmul.bf16.gmra.mxu0 %v402
        %v539 = vpop.f32.mrf.mxu0
        %v540 = vadd.f32 0.0, %v539
        %v541 = vpop.f32.mrf.mxu0
        %v542 = vadd.f32 0.0, %v541
        %543 = vmatmul.bf16.gmra.mxu0 %v404
        %v544 = vpop.f32.mrf.mxu0
        %v545 = vadd.f32 0.0, %v544
        %v546 = vpop.f32.mrf.mxu0
        %v547 = vadd.f32 0.0, %v546
        %548 = vmatmul.bf16.gmra.mxu0 %v406
        %v549 = vpop.f32.mrf.mxu0
        %v550 = vadd.f32 0.0, %v549
        %v551 = vpop.f32.mrf.mxu0
        %v552 = vadd.f32 0.0, %v551
        %553 = vmatmul.bf16.gmra.mxu0 %v408
        %v554 = vpop.f32.mrf.mxu0
        %v555 = vadd.f32 0.0, %v554
        %v556 = vpop.f32.mrf.mxu0
        %v557 = vadd.f32 0.0, %v556
        %558 = vmatmul.bf16.gmra.mxu0 %v410
        %v559 = vpop.f32.mrf.mxu0
        %v560 = vadd.f32 0.0, %v559
        %v561 = vpop.f32.mrf.mxu0
        %v562 = vadd.f32 0.0, %v561
        %563 = vmatmul.bf16.gmra.mxu0 %v412
        %v564 = vpop.f32.mrf.mxu0
        %v565 = vadd.f32 0.0, %v564
        %v566 = vpop.f32.mrf.mxu0
        %v567 = vadd.f32 0.0, %v566
        %568 = vmatmul.bf16.gmra.mxu0 %v414
        %v569 = vpop.f32.mrf.mxu0
        %v570 = vadd.f32 0.0, %v569
        %v571 = vpop.f32.mrf.mxu0
        %v572 = vadd.f32 0.0, %v571
        %573 = vmatmul.bf16.gmra.mxu0 %v416
        %v574 = vpop.f32.mrf.mxu0
        %v575 = vadd.f32 0.0, %v574
        %v576 = vpop.f32.mrf.mxu0
        %v577 = vadd.f32 0.0, %v576
        %578 = vdwg.mxu0
        %579 = vmatpush.bf16.msra.mxu0 %v513
        %580 = vmatpush.bf16.msra.mxu0 %v512
        %581 = vmatpush.bf16.msra.mxu0 %v511
        %582 = vmatpush.bf16.msra.mxu0 %v510
        %583 = vmatpush.bf16.msra.mxu0 %v509
        %584 = vmatpush.bf16.msra.mxu0 %v508
        %585 = vmatpush.bf16.msra.mxu0 %v507
        %586 = vmatpush.bf16.msra.mxu0 %v506
        %587 = vmatmul.bf16.gmra.mxu0 %v403
        %v588 = vpop.f32.mrf.mxu0
        %v589 = vadd.f32 %v540, %v588
        %v590 = vpop.f32.mrf.mxu0
        %v591 = vadd.f32 %v542, %v590
        %592 = vmatmul.bf16.gmra.mxu0 %v405
        %v593 = vpop.f32.mrf.mxu0
        %v594 = vadd.f32 %v545, %v593
        %v595 = vpop.f32.mrf.mxu0
        %v596 = vadd.f32 %v547, %v595
        %597 = vmatmul.bf16.gmra.mxu0 %v407
        %v598 = vpop.f32.mrf.mxu0
        %v599 = vadd.f32 %v550, %v598
        %v600 = vpop.f32.mrf.mxu0
        %v601 = vadd.f32 %v552, %v600
        %602 = vmatmul.bf16.gmra.mxu0 %v409
        %v603 = vpop.f32.mrf.mxu0
        %v604 = vadd.f32 %v555, %v603
        %v605 = vpop.f32.mrf.mxu0
        %v606 = vadd.f32 %v557, %v605
        %607 = vmatmul.bf16.gmra.mxu0 %v411
        %v608 = vpop.f32.mrf.mxu0
        %v609 = vadd.f32 %v560, %v608
        %v610 = vpop.f32.mrf.mxu0
        %v611 = vadd.f32 %v562, %v610
        %612 = vmatmul.bf16.gmra.mxu0 %v413
        %v613 = vpop.f32.mrf.mxu0
        %v614 = vadd.f32 %v565, %v613
        %v615 = vpop.f32.mrf.mxu0
        %v616 = vadd.f32 %v567, %v615
        %617 = vmatmul.bf16.gmra.mxu0 %v415
        %v618 = vpop.f32.mrf.mxu0
        %v619 = vadd.f32 %v570, %v618
        %v620 = vpop.f32.mrf.mxu0
        %v621 = vadd.f32 %v572, %v620
        %622 = vmatmul.bf16.gmra.mxu0 %v417
        %v623 = vpop.f32.mrf.mxu0
        %v624 = vadd.f32 %v575, %v623
        %v625 = vpop.f32.mrf.mxu0
        %v626 = vadd.f32 %v577, %v625
        %627 = vdwg.mxu0
        %v628 = vadd.f32 %v290, %v589
        %v629 = vadd.f32 %v291, %v591
        %v630 = vadd.f32 %v292, %v594
        %v631 = vadd.f32 %v293, %v596
        %v632 = vadd.f32 %v294, %v599
        %v633 = vadd.f32 %v295, %v601
        %v634 = vadd.f32 %v296, %v604
        %v635 = vadd.f32 %v297, %v606
        %v636 = vadd.f32 %v298, %v609
        %v637 = vadd.f32 %v299, %v611
        %v638 = vadd.f32 %v300, %v614
        %v639 = vadd.f32 %v301, %v616
        %v640 = vadd.f32 %v302, %v619
        %v641 = vadd.f32 %v303, %v621
        %v642 = vadd.f32 %v304, %v624
        %v643 = vadd.f32 %v305, %v626
        %644 = vst [vmem:[#allocation2] sm:$0xff] %v628
        %645 = vst [vmem:[#allocation2 + $0x8] sm:$0xff] %v629
        %646 = vst [vmem:[#allocation2 + $0x10] sm:$0xff] %v630
        %647 = vst [vmem:[#allocation2 + $0x18] sm:$0xff] %v631
        %648 = vst [vmem:[#allocation2 + $0x20] sm:$0xff] %v632
        %649 = vst [vmem:[#allocation2 + $0x28] sm:$0xff] %v633
        %650 = vst [vmem:[#allocation2 + $0x30] sm:$0xff] %v634
        %651 = vst [vmem:[#allocation2 + $0x38] sm:$0xff] %v635
        %652 = vst [vmem:[#allocation2 + $0x40] sm:$0xff] %v636
        %653 = vst [vmem:[#allocation2 + $0x48] sm:$0xff] %v637
        %654 = vst [vmem:[#allocation2 + $0x50] sm:$0xff] %v638
        %655 = vst [vmem:[#allocation2 + $0x58] sm:$0xff] %v639
        %656 = vst [vmem:[#allocation2 + $0x60] sm:$0xff] %v640
        %657 = vst [vmem:[#allocation2 + $0x68] sm:$0xff] %v641
        %658 = vst [vmem:[#allocation2 + $0x70] sm:$0xff] %v642
        %659 = vst [vmem:[#allocation2 + $0x78] sm:$0xff] %v643
        // Predicated region
        $region49: #{tpu_custom_call.1} parent=31 // pred_check
          %p660 = pneg %p270
        $region50: #{tpu_custom_call.1} parent=31 // pred_check_branch
          %662 = sbr.rel (%p660) target = $region52
        $region51: #{tpu_custom_call.1} parent=31 // pred_region
          %v663 = vld [vmem:[#allocation2] sm:$0xff]
          %v664 = vld [vmem:[#allocation2 + $0x8] sm:$0xff]
          %v665 = vld [vmem:[#allocation2 + $0x10] sm:$0xff]
          %v666 = vld [vmem:[#allocation2 + $0x18] sm:$0xff]
          %v667 = vld [vmem:[#allocation2 + $0x20] sm:$0xff]
          %v668 = vld [vmem:[#allocation2 + $0x28] sm:$0xff]
          %v669 = vld [vmem:[#allocation2 + $0x30] sm:$0xff]
          %v670 = vld [vmem:[#allocation2 + $0x38] sm:$0xff]
          %v671 = vld [vmem:[#allocation2 + $0x40] sm:$0xff]
          %v672 = vld [vmem:[#allocation2 + $0x48] sm:$0xff]
          %v673 = vld [vmem:[#allocation2 + $0x50] sm:$0xff]
          %v674 = vld [vmem:[#allocation2 + $0x58] sm:$0xff]
          %v675 = vld [vmem:[#allocation2 + $0x60] sm:$0xff]
          %v676 = vld [vmem:[#allocation2 + $0x68] sm:$0xff]
          %v677 = vld [vmem:[#allocation2 + $0x70] sm:$0xff]
          %v678 = vld [vmem:[#allocation2 + $0x78] sm:$0xff]
          %v679 = vld [vmem:[#allocation8] sm:$0x1]
          %v680 = vperm.slane %v679, 0
          %v681 = vmul.f32 %v663, %v680
          %v682 = vmul.f32 %v664, %v680
          %v683 = vmul.f32 %v665, %v680
          %v684 = vmul.f32 %v666, %v680
          %v685 = vmul.f32 %v667, %v680
          %v686 = vmul.f32 %v668, %v680
          %v687 = vmul.f32 %v669, %v680
          %v688 = vmul.f32 %v670, %v680
          %v689 = vmul.f32 %v671, %v680
          %v690 = vmul.f32 %v672, %v680
          %v691 = vmul.f32 %v673, %v680
          %v692 = vmul.f32 %v674, %v680
          %v693 = vmul.f32 %v675, %v680
          %v694 = vmul.f32 %v676, %v680
          %v695 = vmul.f32 %v677, %v680
          %v696 = vmul.f32 %v678, %v680
          %v697 = vld [vmem:[#allocation8 + $0x1] sm:$0x1]
          %v698 = vperm.slane %v697, 0
          %v699 = vadd.f32 %v681, %v698
          %v700 = vadd.f32 %v682, %v698
          %v701 = vadd.f32 %v683, %v698
          %v702 = vadd.f32 %v684, %v698
          %v703 = vadd.f32 %v685, %v698
          %v704 = vadd.f32 %v686, %v698
          %v705 = vadd.f32 %v687, %v698
          %v706 = vadd.f32 %v688, %v698
          %v707 = vadd.f32 %v689, %v698
          %v708 = vadd.f32 %v690, %v698
          %v709 = vadd.f32 %v691, %v698
          %v710 = vadd.f32 %v692, %v698
          %v711 = vadd.f32 %v693, %v698
          %v712 = vadd.f32 %v694, %v698
          %v713 = vadd.f32 %v695, %v698
          %v714 = vadd.f32 %v696, %v698
          %v715 = vmax.f32 %v699, 0.0
          %v716 = vmax.f32 %v700, 0.0
          %v717 = vmax.f32 %v701, 0.0
          %v718 = vmax.f32 %v702, 0.0
          %v719 = vmax.f32 %v703, 0.0
          %v720 = vmax.f32 %v704, 0.0
          %v721 = vmax.f32 %v705, 0.0
          %v722 = vmax.f32 %v706, 0.0
          %v723 = vmax.f32 %v707, 0.0
          %v724 = vmax.f32 %v708, 0.0
          %v725 = vmax.f32 %v709, 0.0
          %v726 = vmax.f32 %v710, 0.0
          %v727 = vmax.f32 %v711, 0.0
          %v728 = vmax.f32 %v712, 0.0
          %v729 = vmax.f32 %v713, 0.0
          %v730 = vmax.f32 %v714, 0.0
          %731 = vst [vmem:[%s265] sm:$0xff] %v715
          %732 = vst [vmem:[%s265 + $0x8] sm:$0xff] %v716
          %733 = vst [vmem:[%s265 + $0x10] sm:$0xff] %v717
          %734 = vst [vmem:[%s265 + $0x18] sm:$0xff] %v718
          %735 = vst [vmem:[%s265 + $0x20] sm:$0xff] %v719
          %736 = vst [vmem:[%s265 + $0x28] sm:$0xff] %v720
          %737 = vst [vmem:[%s265 + $0x30] sm:$0xff] %v721
          %738 = vst [vmem:[%s265 + $0x38] sm:$0xff] %v722
          %739 = vst [vmem:[%s265 + $0x40] sm:$0xff] %v723
          %740 = vst [vmem:[%s265 + $0x48] sm:$0xff] %v724
          %741 = vst [vmem:[%s265 + $0x50] sm:$0xff] %v725
          %742 = vst [vmem:[%s265 + $0x58] sm:$0xff] %v726
          %743 = vst [vmem:[%s265 + $0x60] sm:$0xff] %v727
          %744 = vst [vmem:[%s265 + $0x68] sm:$0xff] %v728
          %745 = vst [vmem:[%s265 + $0x70] sm:$0xff] %v729
          %746 = vst [vmem:[%s265 + $0x78] sm:$0xff] %v730
        $region52: #{tpu_custom_call.1} parent=31 // pred_fallthru
          _
        %s747 = sand.u32 %s132, 1
        %s748 = scalar_lea.sflag [#allocation5], %s747
        %s749 = sand.u32 %s132, 1
        %s750 = smul.addr %s749, 128
        %s751 = scalar_lea.vmem [#allocation9], %s750
        // Predicated region
        $region53: #{tpu_custom_call.1} parent=31 // pred_check
          %p752 = pneg %p142
        $region54: #{tpu_custom_call.1} parent=31 // pred_check_branch
          %754 = sbr.rel (%p752) target = $region56
        $region55: #{tpu_custom_call.1} parent=31 // pred_region
          %s755 = smul.u32 16, %s26
          %757 = vsyncadd %s748, 0
          %s758 = sadd.s32 %s27, %s755
          %s759 = smul.addr %s758, 8
          %s760 = scalar_lea.hbm %s3, %s759
          %s761 = sshll.u32 %s751, 4
          %s762 = int_to_ptr.vmem [resolvable:$true] %s761
          %s763 = sshll.u32 %s760, 4
          %s764 = int_to_ptr.hbm [resolvable:$true] %s763
          %769 = dma.vmem_to_hbm [thread:$0]  %s762, 2048, %s764, %s748, 128, 128, 8
        $region56: #{tpu_custom_call.1} parent=31 // pred_fallthru
          _
      $region32: #{tpu_custom_call.1} parent=5 // pred_fallthru
        _
      %p770 = scmp.le.s32.totalorder 2, %s16
      // Predicated region
      $region57: #{tpu_custom_call.1} parent=5 // pred_check
        %p771 = pneg %p770
      $region58: #{tpu_custom_call.1} parent=5 // pred_check_branch
        %773 = sbr.rel (%p771) target = $region60
      $region59: #{tpu_custom_call.1} parent=5 // pred_region
        %s774 = ssub.s32 %s16, 2
        // Predicated region
        $region61: #{tpu_custom_call.1} parent=59 // pred_check
          %p775 = pneg %p148
        $region62: #{tpu_custom_call.1} parent=59 // pred_check_branch
          %777 = sbr.rel (%p775) target = $region64
        $region63: #{tpu_custom_call.1} parent=59 // pred_region
          %s778 = sand.u32 %s133, 1
          %s779 = scalar_lea.sflag [#allocation5], %s778
          %s780 = sand.u32 %s133, 1
          %s781 = smul.addr %s780, 128
          %s782 = scalar_lea.vmem [#allocation9], %s781
          %784 = dma.done %s779, 2048
        $region64: #{tpu_custom_call.1} parent=59 // pred_fallthru
          _
      $region60: #{tpu_custom_call.1} parent=5 // pred_fallthru
        _
    $region6: #{tpu_custom_call.1} parent=1 // loop_footer
      %s20 = sadd.s32 1, %s16
    $region7: #{tpu_custom_call.1} parent=1 // loop_footer_branch
      %15 = sbr.rel target = $region3
    $region8: #{tpu_custom_call.1} parent=1 // loop_exit
      _
    %785 = vsyncpa [#allocation4], 1
    %s786 = scalar_lea.sflag [#allocation4], 1
    %787 = vsyncpa %s786, 1
    %788 = vsyncpa [#allocation7], 1
    %789 = vsyncpa [#allocation5], 1
    %s790 = scalar_lea.sflag [#allocation5], 1
    %791 = vsyncpa %s790, 1

</llo_original>
